<compile_context>
chip_gen: v7x
topology: tpu7x:2x2x1
jax: 0.10.0
libtpu: 0.0.40
codegen_flags: <defaults>
</compile_context>

<pallas_src>
import functools

import jax
import jax.numpy as jnp
from jax import lax
from jax.experimental import pallas as pl
from jax.experimental.pallas import tpu as pltpu

# TODO(synk): FENet implementation is not provided in the reference source; the
# feature extractor here is a synthetic stand-in (GAP + linear projection).

EPS = 1e-12  # F.normalize default eps


def _round_up(n, m):
    return ((n + m - 1) // m) * m


def _disc_kernel(scale_ref, x_ref, w_ref, pnT_ref, pnsq_ref, out_ref, *,
                 temperature):
    # x_ref:   [tb, HW, C]   (flattened NHWC tile)
    # w_ref:   [C, F]        (projection weight, 1/HW pre-folded)
    # pnT_ref: [F, K]        (pre-normalized prototypes, transposed)
    # pnsq_ref:[1, K]        (||pn||^2 per class; 1 for real, 0 for pad rows)
    # out_ref: [tb, K]
    x = x_ref[...].astype(jnp.float32)

    # Fused global average pool: sublane reduce over the spatial axis gives a
    # lane-dense [tb, C] tile that feeds the MXU directly (1/HW lives in w).
    pooled = jnp.sum(x, axis=1)                                   # [tb, C]

    # Stand-in linear projection on the MXU.
    feats = jnp.dot(pooled, w_ref[...],
                    preferred_element_type=jnp.float32)           # [tb, F]

    # F.normalize(features): x * rsqrt(max(||x||^2, eps^2))  (EUP rsqrt).
    f_ss = jnp.sum(feats * feats, axis=-1, keepdims=True)         # [tb, 1]
    inv = lax.rsqrt(jnp.maximum(f_ss, EPS * EPS))
    fn = feats * inv                                              # [tb, F]
    fn_ss = f_ss * (inv * inv)                                    # ||fn||^2

    # cdist via the norm identity, one MXU matmul, lane-dense [tb, K] result.
    dot = jnp.dot(fn, pnT_ref[...],
                  preferred_element_type=jnp.float32)             # [tb, K]
    d2 = jnp.maximum(fn_ss + pnsq_ref[...] - 2.0 * dot, 0.0)
    dist = jnp.sqrt(d2)                                           # [tb, K]

    # logits = -(|distance_scale| * dist) / temperature, folded to one scalar.
    factor = -jnp.abs(scale_ref[0]) * (1.0 / temperature)
    out_ref[...] = (dist * factor).astype(out_ref.dtype)


def disc_forward(x, proj_w, prototypes, distance_scale, *,
                 temperature=1.0, batch_block=128,
                 stream_dtype=jnp.float32):
    """x: [B, C, H, W] (NCHW).  Returns logits [B, num_classes] (f32).

    stream_dtype=jnp.bfloat16 halves HBM traffic on v6e/v7x (kernel is
    bandwidth-bound on x); kept f32 by default for bit-tight validation.
    """
    B, C, H, W = x.shape
    K, F_dim = prototypes.shape
    HW = H * W

    # Padded, lane-dense shapes.
    C_pad = _round_up(C, 8)
    F_pad = _round_up(F_dim, 128)
    K_pad = _round_up(K, 128)

    # Batch tiling: cap at batch_block, keep tiles 8-row aligned, pad B up.
    tb = min(batch_block, _round_up(B, 8))
    B_pad = _round_up(B, tb)
    grid = (B_pad // tb,)

    # Layout: NCHW -> flattened NHWC [B, HW, C] (one XLA transpose, cheaper
    # than a per-tile relayout of a lane-singleton pooled tensor).
    x3 = jnp.transpose(x, (0, 2, 3, 1)).reshape(B, HW, C).astype(stream_dtype)
    x3 = jnp.pad(x3, ((0, B_pad - B), (0, 0), (0, C_pad - C)))

    # Fold the GAP's 1/HW into the projection weight; zero-pad to (C_pad,F_pad).
    w = proj_w.astype(jnp.float32) * (1.0 / HW)
    w = jnp.pad(w, ((0, C_pad - C), (0, F_pad - F_dim)))

    # Prototype normalization hoisted out of the kernel (one-time K*F work).
    p = prototypes.astype(jnp.float32)
    pn = p / jnp.maximum(jnp.linalg.norm(p, axis=-1, keepdims=True), EPS)
    pn = jnp.pad(pn, ((0, K_pad - K), (0, F_pad - F_dim)))   # pad rows are 0
    pnT = pn.T                                                # [F_pad, K_pad]
    pn_sq = jnp.sum(pn * pn, axis=-1)[None, :]                # [1, K_pad]

    # VMEM budget: double-buffered x tile + resident weights + slack, clamped
    # to a range valid on every generation (v7x physical VMEM is 64 MiB/TC).
    x_tile_bytes = tb * HW * C_pad * jnp.dtype(stream_dtype).itemsize
    resident_bytes = (C_pad * F_pad + F_pad * K_pad + K_pad
                      + 2 * tb * K_pad) * 4
    vmem_bytes = int(min(max(2 * x_tile_bytes + 2 * resident_bytes + (4 << 20),
                             16 << 20), 48 << 20))

    kernel = functools.partial(_disc_kernel, temperature=float(temperature))

    out = pl.pallas_call(
        kernel,
        out_shape=jax.ShapeDtypeStruct((B_pad, K_pad), jnp.float32),
        grid=grid,
        in_specs=[
            # distance_scale: scalar in SMEM, whole array.
            pl.BlockSpec(memory_space=pltpu.MemorySpace.SMEM),
            # x: tiled over batch; (HW, C_pad) are full dims so (8,128) holds.
            pl.BlockSpec((tb, HW, C_pad), lambda i: (i, 0, 0)),
            # Projection weight, transposed prototypes and their squared norms
            # stay resident across the grid (constant index maps).
            pl.BlockSpec((C_pad, F_pad), lambda i: (0, 0)),
            pl.BlockSpec((F_pad, K_pad), lambda i: (0, 0)),
            pl.BlockSpec((1, K_pad), lambda i: (0, 0)),
        ],
        out_specs=pl.BlockSpec((tb, K_pad), lambda i: (i, 0)),
        compiler_params=pltpu.CompilerParams(
            dimension_semantics=("parallel",),
            vmem_limit_bytes=vmem_bytes),
    )(distance_scale, x3, w, pnT, pn_sq)

    # Slice away batch / class padding.
    return out[:B, :K]


def _reference(x, proj_w, prototypes, distance_scale, temperature=1.0):
    pooled = jnp.mean(x.astype(jnp.float32), axis=(2, 3))
    feats = jnp.dot(pooled, proj_w, precision=lax.Precision.HIGHEST)
    fn = feats / jnp.maximum(
        jnp.linalg.norm(feats, axis=-1, keepdims=True), EPS)
    pn = prototypes / jnp.maximum(
        jnp.linalg.norm(prototypes, axis=-1, keepdims=True), EPS)
    diff = fn[:, None, :] - pn[None, :, :]
    dist = jnp.sqrt(jnp.sum(diff * diff, axis=-1))
    return -(jnp.abs(distance_scale[0]) * dist) / temperature


if __name__ == "__main__":
    key = jax.random.PRNGKey(0)
    k_x, k_w, k_p = jax.random.split(key, 3)

    B, C, H, W = 2, 4, 16, 16       # input image (NCHW)
    num_features = 32               # stand-in for feature_extractor.stage7[0].out_channels
    num_classes = 2

    x = jax.random.normal(k_x, (B, C, H, W), dtype=jnp.float32)
    proj_w = jax.random.normal(k_w, (C, num_features), dtype=jnp.float32) * 0.1
    # nn.init.normal_(prototypes, mean=0.0, std=1.0)
    prototypes = jax.random.normal(k_p, (num_classes, num_features),
                                   dtype=jnp.float32)
    # nn.init.constant_(distance_scale, 1.0)
    distance_scale = jnp.ones((1,), dtype=jnp.float32)

    logits = jax.jit(disc_forward)(x, proj_w, prototypes, distance_scale)
    jax.block_until_ready(logits)

    ref = _reference(x, proj_w, prototypes, distance_scale)
    assert logits.shape == (B, num_classes)
    # Tolerance covers the MXU's f32-via-bf16-pass matmul precision (the
    # reference uses HIGHEST-precision XLA dots); typical error is <<1e-4.
    assert jnp.allclose(logits, ref, atol=2e-2, rtol=2e-2), (logits, ref)

    print("KERNEL_OK")
</pallas_src>

<mosaic_0001>
module attributes {stable_mosaic.version = 11 : i64} {
  func.func @_disc_kernel(%arg0: i32, %arg1: memref<1xf32, #tpu.memory_space<smem>>, %arg2: memref<8x256x8xf32, #tpu.memory_space<vmem>>, %arg3: memref<8x128xf32, #tpu.memory_space<vmem>>, %arg4: memref<128x128xf32, #tpu.memory_space<vmem>>, %arg5: memref<1x128xf32, #tpu.memory_space<vmem>>, %arg6: memref<8x128xf32, #tpu.memory_space<vmem>>) attributes {dimension_semantics = [#tpu.dimension_semantics<parallel>], iteration_bounds = array<i64: 1>, scalar_prefetch = 0 : i64, scratch_operands = 0 : i64, tpu.core_type = #tpu.core_type<tc>, window_params = [{transform_indices = @transform_0, window_bounds = array<i64: 1>}, {transform_indices = @transform_1, window_bounds = array<i64: 8, 256, 8>}, {pipeline_mode = #tpu.pipeline_mode<synchronous>, transform_indices = @transform_2, window_bounds = array<i64: 8, 128>}, {pipeline_mode = #tpu.pipeline_mode<synchronous>, transform_indices = @transform_3, window_bounds = array<i64: 128, 128>}, {pipeline_mode = #tpu.pipeline_mode<synchronous>, transform_indices = @transform_4, window_bounds = array<i64: 1, 128>}, {transform_indices = @transform_5, window_bounds = array<i64: 8, 128>}]} {
    %c0 = arith.constant 0 : index
    %c0_0 = arith.constant 0 : index
    %c0_1 = arith.constant 0 : index
    %0 = vector.load %arg2[%c0, %c0_0, %c0_1] : memref<8x256x8xf32, #tpu.memory_space<vmem>>, vector<8x256x8xf32>
    %cst = arith.constant dense<0.000000e+00> : vector<8x8xf32>
    %1 = vector.multi_reduction <add>, %0, %cst [1] : vector<8x256x8xf32> to vector<8x8xf32>
    %c0_2 = arith.constant 0 : index
    %c0_3 = arith.constant 0 : index
    %2 = vector.load %arg3[%c0_2, %c0_3] : memref<8x128xf32, #tpu.memory_space<vmem>>, vector<8x128xf32>
    %cst_4 = arith.constant dense<0.000000e+00> : vector<8x128xf32>
    %3 = tpu.matmul %1, %2, %cst_4 {dimension_numbers = #tpu.dot_dimension_numbers<[1], [0], [0], [1], [0, 0, 1, 1], [], []>} : vector<8x8xf32>, vector<8x128xf32>, vector<8x128xf32> -> vector<8x128xf32>
    %4 = arith.mulf %3, %3 : vector<8x128xf32>
    %cst_5 = arith.constant dense<0.000000e+00> : vector<8xf32>
    %5 = vector.multi_reduction <add>, %4, %cst_5 [1] : vector<8x128xf32> to vector<8xf32>
    %6 = vector.shape_cast %5 : vector<8xf32> to vector<8x1xf32>
    %cst_6 = arith.constant 1.000000e-24 : f32
    %7 = vector.broadcast %cst_6 : f32 to vector<8x1xf32>
    %8 = arith.maximumf %6, %7 : vector<8x1xf32>
    %9 = math.rsqrt %8 : vector<8x1xf32>
    %10 = vector.broadcast %9 : vector<8x1xf32> to vector<8x128xf32>
    %11 = arith.mulf %3, %10 : vector<8x128xf32>
    %12 = arith.mulf %9, %9 : vector<8x1xf32>
    %13 = arith.mulf %6, %12 : vector<8x1xf32>
    %c0_7 = arith.constant 0 : index
    %c0_8 = arith.constant 0 : index
    %14 = vector.load %arg4[%c0_7, %c0_8] : memref<128x128xf32, #tpu.memory_space<vmem>>, vector<128x128xf32>
    %cst_9 = arith.constant dense<0.000000e+00> : vector<8x128xf32>
    %15 = tpu.matmul %11, %14, %cst_9 {dimension_numbers = #tpu.dot_dimension_numbers<[1], [0], [0], [1], [0, 0, 1, 1], [], []>} : vector<8x128xf32>, vector<128x128xf32>, vector<8x128xf32> -> vector<8x128xf32>
    %c0_10 = arith.constant 0 : index
    %c0_11 = arith.constant 0 : index
    %16 = vector.load %arg5[%c0_10, %c0_11] : memref<1x128xf32, #tpu.memory_space<vmem>>, vector<1x128xf32>
    %17 = vector.broadcast %13 : vector<8x1xf32> to vector<8x128xf32>
    %18 = vector.broadcast %16 : vector<1x128xf32> to vector<8x128xf32>
    %19 = arith.addf %17, %18 : vector<8x128xf32>
    %cst_12 = arith.constant 2.000000e+00 : f32
    %20 = vector.broadcast %cst_12 : f32 to vector<8x128xf32>
    %21 = arith.mulf %20, %15 : vector<8x128xf32>
    %22 = arith.subf %19, %21 : vector<8x128xf32>
    %cst_13 = arith.constant 0.000000e+00 : f32
    %23 = vector.broadcast %cst_13 : f32 to vector<8x128xf32>
    %24 = arith.maximumf %22, %23 : vector<8x128xf32>
    %25 = math.sqrt %24 : vector<8x128xf32>
    %c0_14 = arith.constant 0 : index
    %26 = memref.load %arg1[%c0_14] : memref<1xf32, #tpu.memory_space<smem>>
    %27 = math.absf %26 : f32
    %cst_15 = arith.constant 0.000000e+00 : f32
    %28 = arith.subf %cst_15, %27 : f32
    %cst_16 = arith.constant 1.000000e+00 : f32
    %29 = arith.mulf %28, %cst_16 : f32
    %30 = vector.broadcast %29 : f32 to vector<8x128xf32>
    %31 = arith.mulf %25, %30 : vector<8x128xf32>
    %c0_17 = arith.constant 0 : index
    %c0_18 = arith.constant 0 : index
    %32 = vector.load %arg6[%c0_17, %c0_18] : memref<8x128xf32, #tpu.memory_space<vmem>>, vector<8x128xf32>
    tpu.vector_store %arg6[%c0_17, %c0_18], %31 {strides = array<i32>} : memref<8x128xf32, #tpu.memory_space<vmem>>, vector<8x128xf32>,
    return
  }
  func.func @transform_0(%arg0: i32) -> i32 {
    %c0_i32 = arith.constant 0 : i32
    %c0_i32_0 = arith.constant 0 : i32
    return %c0_i32 : i32
  }
  func.func @transform_1(%arg0: i32) -> (i32, i32, i32) {
    %c0_i32 = arith.constant 0 : i32
    %c0_i32_0 = arith.constant 0 : i32
    %c0_i32_1 = arith.constant 0 : i32
    return %arg0, %c0_i32, %c0_i32_0 : i32, i32, i32
  }
  func.func @transform_2(%arg0: i32) -> (i32, i32) {
    %c0_i32 = arith.constant 0 : i32
    %c0_i32_0 = arith.constant 0 : i32
    %c0_i32_1 = arith.constant 0 : i32
    return %c0_i32, %c0_i32_0 : i32, i32
  }
  func.func @transform_3(%arg0: i32) -> (i32, i32) {
    %c0_i32 = arith.constant 0 : i32
    %c0_i32_0 = arith.constant 0 : i32
    %c0_i32_1 = arith.constant 0 : i32
    return %c0_i32, %c0_i32_0 : i32, i32
  }
  func.func @transform_4(%arg0: i32) -> (i32, i32) {
    %c0_i32 = arith.constant 0 : i32
    %c0_i32_0 = arith.constant 0 : i32
    %c0_i32_1 = arith.constant 0 : i32
    return %c0_i32, %c0_i32_0 : i32, i32
  }
  func.func @transform_5(%arg0: i32) -> (i32, i32) {
    %c0_i32 = arith.constant 0 : i32
    %c0_i32_0 = arith.constant 0 : i32
    return %arg0, %c0_i32 : i32, i32
  }
}

</mosaic_0001>

<llo_original>
// kernel: disc_forward.1
$region0: #{disc_forward.1}
  #allocation0 [shape = 'u32[]', space=smem, size = 0x4, offset = 0x4, fixed_abs, tag = 'smem constant byte address 0x4 - core index']
  #allocation1 [shape = 'u32[144,128]{1,0:T(1,128)}', space=vmem, size = 0x12000, scoped, tag = 'internal scratch']
  #allocation2 [shape = 'f32[1]{0:T(128)S(6)}', space=smem, size = 0x200, scoped, tag = 'scoped memory for disc_forward.1']
  %s0 = inlined_call_operand.<no memory space> [shape: f32[1], index: 0, kind: input, shape index: {}]
  %s1 = inlined_call_operand.vmem [shape: f32[8,256,8], index: 1, kind: input, shape index: {}]
  %s2 = inlined_call_operand.vmem [shape: f32[8,128], index: 2, kind: input, shape index: {}]
  %s3 = inlined_call_operand.vmem [shape: f32[128,128], index: 3, kind: input, shape index: {}]
  %s4 = inlined_call_operand.vmem [shape: f32[1,128], index: 4, kind: input, shape index: {}]
  %s5 = inlined_call_operand.vmem [shape: f32[8,128], index: 5, kind: output, shape index: {}]
  %s6 = sld [smem:[#allocation0]]
  $region30: #{disc_forward.1} parent=0
    _
  %s8 = ssub.s32 1, %s6
  %s9 = scalar_select 0, %s8, %s6
  %10 = sst [smem:[#allocation2]] %s0
  // Predicated region
  $region2: #{disc_forward.1} parent=0 // pred_check
    _
  $region3: #{disc_forward.1} parent=0 // pred_check_branch
    %12 = sbr.rel (0) target = $region5
  $region4: #{disc_forward.1} parent=0 // pred_region
    _
  $region5: #{disc_forward.1} parent=0 // pred_fallthru
    _
  // Predicated region
  $region6: #{disc_forward.1} parent=0 // pred_check
    _
  $region7: #{disc_forward.1} parent=0 // pred_check_branch
    %14 = sbr.rel (0) target = $region9
  $region8: #{disc_forward.1} parent=0 // pred_region
    _
  $region9: #{disc_forward.1} parent=0 // pred_fallthru
    _
  // Predicated region
  $region10: #{disc_forward.1} parent=0 // pred_check
    _
  $region11: #{disc_forward.1} parent=0 // pred_check_branch
    %16 = sbr.rel (0) target = $region13
  $region12: #{disc_forward.1} parent=0 // pred_region
    _
  $region13: #{disc_forward.1} parent=0 // pred_fallthru
    _
  // Predicated region
  $region14: #{disc_forward.1} parent=0 // pred_check
    _
  $region15: #{disc_forward.1} parent=0 // pred_check_branch
    %18 = sbr.rel (0) target = $region17
  $region16: #{disc_forward.1} parent=0 // pred_region
    _
  $region17: #{disc_forward.1} parent=0 // pred_fallthru
    _
  // Predicated region
  $region18: #{disc_forward.1} parent=0 // pred_check
    _
  $region19: #{disc_forward.1} parent=0 // pred_check_branch
    %20 = sbr.rel (0) target = $region21
  $region20: #{disc_forward.1} parent=0 // pred_region
    _
  $region21: #{disc_forward.1} parent=0 // pred_fallthru
    _
  %v21 = vld [vmem:[%s1] sm:$0xff]
  %v22 = vld [vmem:[%s1 + $0x8] sm:$0xff]
  %v23 = vld [vmem:[%s1 + $0x10] sm:$0xff]
  %v24 = vld [vmem:[%s1 + $0x18] sm:$0xff]
  %v25 = vld [vmem:[%s1 + $0x20] sm:$0xff]
  %v26 = vld [vmem:[%s1 + $0x28] sm:$0xff]
  %v27 = vld [vmem:[%s1 + $0x30] sm:$0xff]
  %v28 = vld [vmem:[%s1 + $0x38] sm:$0xff]
  %v29 = vld [vmem:[%s1 + $0x40] sm:$0xff]
  %v30 = vld [vmem:[%s1 + $0x48] sm:$0xff]
  %v31 = vld [vmem:[%s1 + $0x50] sm:$0xff]
  %v32 = vld [vmem:[%s1 + $0x58] sm:$0xff]
  %v33 = vld [vmem:[%s1 + $0x60] sm:$0xff]
  %v34 = vld [vmem:[%s1 + $0x68] sm:$0xff]
  %v35 = vld [vmem:[%s1 + $0x70] sm:$0xff]
  %v36 = vld [vmem:[%s1 + $0x78] sm:$0xff]
  %v37 = vld [vmem:[%s1 + $0x80] sm:$0xff]
  %v38 = vld [vmem:[%s1 + $0x88] sm:$0xff]
  %v39 = vld [vmem:[%s1 + $0x90] sm:$0xff]
  %v40 = vld [vmem:[%s1 + $0x98] sm:$0xff]
  %v41 = vld [vmem:[%s1 + $0xa0] sm:$0xff]
  %v42 = vld [vmem:[%s1 + $0xa8] sm:$0xff]
  %v43 = vld [vmem:[%s1 + $0xb0] sm:$0xff]
  %v44 = vld [vmem:[%s1 + $0xb8] sm:$0xff]
  %v45 = vld [vmem:[%s1 + $0xc0] sm:$0xff]
  %v46 = vld [vmem:[%s1 + $0xc8] sm:$0xff]
  %v47 = vld [vmem:[%s1 + $0xd0] sm:$0xff]
  %v48 = vld [vmem:[%s1 + $0xd8] sm:$0xff]
  %v49 = vld [vmem:[%s1 + $0xe0] sm:$0xff]
  %v50 = vld [vmem:[%s1 + $0xe8] sm:$0xff]
  %v51 = vld [vmem:[%s1 + $0xf0] sm:$0xff]
  %v52 = vld [vmem:[%s1 + $0xf8] sm:$0xff]
  %v53 = vld [vmem:[%s1 + $0x100] sm:$0xff]
  %v54 = vld [vmem:[%s1 + $0x108] sm:$0xff]
  %v55 = vld [vmem:[%s1 + $0x110] sm:$0xff]
  %v56 = vld [vmem:[%s1 + $0x118] sm:$0xff]
  %v57 = vld [vmem:[%s1 + $0x120] sm:$0xff]
  %v58 = vld [vmem:[%s1 + $0x128] sm:$0xff]
  %v59 = vld [vmem:[%s1 + $0x130] sm:$0xff]
  %v60 = vld [vmem:[%s1 + $0x138] sm:$0xff]
  %v61 = vld [vmem:[%s1 + $0x140] sm:$0xff]
  %v62 = vld [vmem:[%s1 + $0x148] sm:$0xff]
  %v63 = vld [vmem:[%s1 + $0x150] sm:$0xff]
  %v64 = vld [vmem:[%s1 + $0x158] sm:$0xff]
  %v65 = vld [vmem:[%s1 + $0x160] sm:$0xff]
  %v66 = vld [vmem:[%s1 + $0x168] sm:$0xff]
  %v67 = vld [vmem:[%s1 + $0x170] sm:$0xff]
  %v68 = vld [vmem:[%s1 + $0x178] sm:$0xff]
  %v69 = vld [vmem:[%s1 + $0x180] sm:$0xff]
  %v70 = vld [vmem:[%s1 + $0x188] sm:$0xff]
  %v71 = vld [vmem:[%s1 + $0x190] sm:$0xff]
  %v72 = vld [vmem:[%s1 + $0x198] sm:$0xff]
  %v73 = vld [vmem:[%s1 + $0x1a0] sm:$0xff]
  %v74 = vld [vmem:[%s1 + $0x1a8] sm:$0xff]
  %v75 = vld [vmem:[%s1 + $0x1b0] sm:$0xff]
  %v76 = vld [vmem:[%s1 + $0x1b8] sm:$0xff]
  %v77 = vld [vmem:[%s1 + $0x1c0] sm:$0xff]
  %v78 = vld [vmem:[%s1 + $0x1c8] sm:$0xff]
  %v79 = vld [vmem:[%s1 + $0x1d0] sm:$0xff]
  %v80 = vld [vmem:[%s1 + $0x1d8] sm:$0xff]
  %v81 = vld [vmem:[%s1 + $0x1e0] sm:$0xff]
  %v82 = vld [vmem:[%s1 + $0x1e8] sm:$0xff]
  %v83 = vld [vmem:[%s1 + $0x1f0] sm:$0xff]
  %v84 = vld [vmem:[%s1 + $0x1f8] sm:$0xff]
  %v85 = vld [vmem:[%s1 + $0x200] sm:$0xff]
  %v86 = vld [vmem:[%s1 + $0x208] sm:$0xff]
  %v87 = vld [vmem:[%s1 + $0x210] sm:$0xff]
  %v88 = vld [vmem:[%s1 + $0x218] sm:$0xff]
  %v89 = vld [vmem:[%s1 + $0x220] sm:$0xff]
  %v90 = vld [vmem:[%s1 + $0x228] sm:$0xff]
  %v91 = vld [vmem:[%s1 + $0x230] sm:$0xff]
  %v92 = vld [vmem:[%s1 + $0x238] sm:$0xff]
  %v93 = vld [vmem:[%s1 + $0x240] sm:$0xff]
  %v94 = vld [vmem:[%s1 + $0x248] sm:$0xff]
  %v95 = vld [vmem:[%s1 + $0x250] sm:$0xff]
  %v96 = vld [vmem:[%s1 + $0x258] sm:$0xff]
  %v97 = vld [vmem:[%s1 + $0x260] sm:$0xff]
  %v98 = vld [vmem:[%s1 + $0x268] sm:$0xff]
  %v99 = vld [vmem:[%s1 + $0x270] sm:$0xff]
  %v100 = vld [vmem:[%s1 + $0x278] sm:$0xff]
  %v101 = vld [vmem:[%s1 + $0x280] sm:$0xff]
  %v102 = vld [vmem:[%s1 + $0x288] sm:$0xff]
  %v103 = vld [vmem:[%s1 + $0x290] sm:$0xff]
  %v104 = vld [vmem:[%s1 + $0x298] sm:$0xff]
  %v105 = vld [vmem:[%s1 + $0x2a0] sm:$0xff]
  %v106 = vld [vmem:[%s1 + $0x2a8] sm:$0xff]
  %v107 = vld [vmem:[%s1 + $0x2b0] sm:$0xff]
  %v108 = vld [vmem:[%s1 + $0x2b8] sm:$0xff]
  %v109 = vld [vmem:[%s1 + $0x2c0] sm:$0xff]
  %v110 = vld [vmem:[%s1 + $0x2c8] sm:$0xff]
  %v111 = vld [vmem:[%s1 + $0x2d0] sm:$0xff]
  %v112 = vld [vmem:[%s1 + $0x2d8] sm:$0xff]
  %v113 = vld [vmem:[%s1 + $0x2e0] sm:$0xff]
  %v114 = vld [vmem:[%s1 + $0x2e8] sm:$0xff]
  %v115 = vld [vmem:[%s1 + $0x2f0] sm:$0xff]
  %v116 = vld [vmem:[%s1 + $0x2f8] sm:$0xff]
  %v117 = vld [vmem:[%s1 + $0x300] sm:$0xff]
  %v118 = vld [vmem:[%s1 + $0x308] sm:$0xff]
  %v119 = vld [vmem:[%s1 + $0x310] sm:$0xff]
  %v120 = vld [vmem:[%s1 + $0x318] sm:$0xff]
  %v121 = vld [vmem:[%s1 + $0x320] sm:$0xff]
  %v122 = vld [vmem:[%s1 + $0x328] sm:$0xff]
  %v123 = vld [vmem:[%s1 + $0x330] sm:$0xff]
  %v124 = vld [vmem:[%s1 + $0x338] sm:$0xff]
  %v125 = vld [vmem:[%s1 + $0x340] sm:$0xff]
  %v126 = vld [vmem:[%s1 + $0x348] sm:$0xff]
  %v127 = vld [vmem:[%s1 + $0x350] sm:$0xff]
  %v128 = vld [vmem:[%s1 + $0x358] sm:$0xff]
  %v129 = vld [vmem:[%s1 + $0x360] sm:$0xff]
  %v130 = vld [vmem:[%s1 + $0x368] sm:$0xff]
  %v131 = vld [vmem:[%s1 + $0x370] sm:$0xff]
  %v132 = vld [vmem:[%s1 + $0x378] sm:$0xff]
  %v133 = vld [vmem:[%s1 + $0x380] sm:$0xff]
  %v134 = vld [vmem:[%s1 + $0x388] sm:$0xff]
  %v135 = vld [vmem:[%s1 + $0x390] sm:$0xff]
  %v136 = vld [vmem:[%s1 + $0x398] sm:$0xff]
  %v137 = vld [vmem:[%s1 + $0x3a0] sm:$0xff]
  %v138 = vld [vmem:[%s1 + $0x3a8] sm:$0xff]
  %v139 = vld [vmem:[%s1 + $0x3b0] sm:$0xff]
  %v140 = vld [vmem:[%s1 + $0x3b8] sm:$0xff]
  %v141 = vld [vmem:[%s1 + $0x3c0] sm:$0xff]
  %v142 = vld [vmem:[%s1 + $0x3c8] sm:$0xff]
  %v143 = vld [vmem:[%s1 + $0x3d0] sm:$0xff]
  %v144 = vld [vmem:[%s1 + $0x3d8] sm:$0xff]
  %v145 = vld [vmem:[%s1 + $0x3e0] sm:$0xff]
  %v146 = vld [vmem:[%s1 + $0x3e8] sm:$0xff]
  %v147 = vld [vmem:[%s1 + $0x3f0] sm:$0xff]
  %v148 = vld [vmem:[%s1 + $0x3f8] sm:$0xff]
  %v149 = vld [vmem:[%s1 + $0x400] sm:$0xff]
  %v150 = vld [vmem:[%s1 + $0x408] sm:$0xff]
  %v151 = vld [vmem:[%s1 + $0x410] sm:$0xff]
  %v152 = vld [vmem:[%s1 + $0x418] sm:$0xff]
  %v153 = vld [vmem:[%s1 + $0x420] sm:$0xff]
  %v154 = vld [vmem:[%s1 + $0x428] sm:$0xff]
  %v155 = vld [vmem:[%s1 + $0x430] sm:$0xff]
  %v156 = vld [vmem:[%s1 + $0x438] sm:$0xff]
  %v157 = vld [vmem:[%s1 + $0x440] sm:$0xff]
  %v158 = vld [vmem:[%s1 + $0x448] sm:$0xff]
  %v159 = vld [vmem:[%s1 + $0x450] sm:$0xff]
  %v160 = vld [vmem:[%s1 + $0x458] sm:$0xff]
  %v161 = vld [vmem:[%s1 + $0x460] sm:$0xff]
  %v162 = vld [vmem:[%s1 + $0x468] sm:$0xff]
  %v163 = vld [vmem:[%s1 + $0x470] sm:$0xff]
  %v164 = vld [vmem:[%s1 + $0x478] sm:$0xff]
  %v165 = vld [vmem:[%s1 + $0x480] sm:$0xff]
  %v166 = vld [vmem:[%s1 + $0x488] sm:$0xff]
  %v167 = vld [vmem:[%s1 + $0x490] sm:$0xff]
  %v168 = vld [vmem:[%s1 + $0x498] sm:$0xff]
  %v169 = vld [vmem:[%s1 + $0x4a0] sm:$0xff]
  %v170 = vld [vmem:[%s1 + $0x4a8] sm:$0xff]
  %v171 = vld [vmem:[%s1 + $0x4b0] sm:$0xff]
  %v172 = vld [vmem:[%s1 + $0x4b8] sm:$0xff]
  %v173 = vld [vmem:[%s1 + $0x4c0] sm:$0xff]
  %v174 = vld [vmem:[%s1 + $0x4c8] sm:$0xff]
  %v175 = vld [vmem:[%s1 + $0x4d0] sm:$0xff]
  %v176 = vld [vmem:[%s1 + $0x4d8] sm:$0xff]
  %v177 = vld [vmem:[%s1 + $0x4e0] sm:$0xff]
  %v178 = vld [vmem:[%s1 + $0x4e8] sm:$0xff]
  %v179 = vld [vmem:[%s1 + $0x4f0] sm:$0xff]
  %v180 = vld [vmem:[%s1 + $0x4f8] sm:$0xff]
  %v181 = vld [vmem:[%s1 + $0x500] sm:$0xff]
  %v182 = vld [vmem:[%s1 + $0x508] sm:$0xff]
  %v183 = vld [vmem:[%s1 + $0x510] sm:$0xff]
  %v184 = vld [vmem:[%s1 + $0x518] sm:$0xff]
  %v185 = vld [vmem:[%s1 + $0x520] sm:$0xff]
  %v186 = vld [vmem:[%s1 + $0x528] sm:$0xff]
  %v187 = vld [vmem:[%s1 + $0x530] sm:$0xff]
  %v188 = vld [vmem:[%s1 + $0x538] sm:$0xff]
  %v189 = vld [vmem:[%s1 + $0x540] sm:$0xff]
  %v190 = vld [vmem:[%s1 + $0x548] sm:$0xff]
  %v191 = vld [vmem:[%s1 + $0x550] sm:$0xff]
  %v192 = vld [vmem:[%s1 + $0x558] sm:$0xff]
  %v193 = vld [vmem:[%s1 + $0x560] sm:$0xff]
  %v194 = vld [vmem:[%s1 + $0x568] sm:$0xff]
  %v195 = vld [vmem:[%s1 + $0x570] sm:$0xff]
  %v196 = vld [vmem:[%s1 + $0x578] sm:$0xff]
  %v197 = vld [vmem:[%s1 + $0x580] sm:$0xff]
  %v198 = vld [vmem:[%s1 + $0x588] sm:$0xff]
  %v199 = vld [vmem:[%s1 + $0x590] sm:$0xff]
  %v200 = vld [vmem:[%s1 + $0x598] sm:$0xff]
  %v201 = vld [vmem:[%s1 + $0x5a0] sm:$0xff]
  %v202 = vld [vmem:[%s1 + $0x5a8] sm:$0xff]
  %v203 = vld [vmem:[%s1 + $0x5b0] sm:$0xff]
  %v204 = vld [vmem:[%s1 + $0x5b8] sm:$0xff]
  %v205 = vld [vmem:[%s1 + $0x5c0] sm:$0xff]
  %v206 = vld [vmem:[%s1 + $0x5c8] sm:$0xff]
  %v207 = vld [vmem:[%s1 + $0x5d0] sm:$0xff]
  %v208 = vld [vmem:[%s1 + $0x5d8] sm:$0xff]
  %v209 = vld [vmem:[%s1 + $0x5e0] sm:$0xff]
  %v210 = vld [vmem:[%s1 + $0x5e8] sm:$0xff]
  %v211 = vld [vmem:[%s1 + $0x5f0] sm:$0xff]
  %v212 = vld [vmem:[%s1 + $0x5f8] sm:$0xff]
  %v213 = vld [vmem:[%s1 + $0x600] sm:$0xff]
  %v214 = vld [vmem:[%s1 + $0x608] sm:$0xff]
  %v215 = vld [vmem:[%s1 + $0x610] sm:$0xff]
  %v216 = vld [vmem:[%s1 + $0x618] sm:$0xff]
  %v217 = vld [vmem:[%s1 + $0x620] sm:$0xff]
  %v218 = vld [vmem:[%s1 + $0x628] sm:$0xff]
  %v219 = vld [vmem:[%s1 + $0x630] sm:$0xff]
  %v220 = vld [vmem:[%s1 + $0x638] sm:$0xff]
  %v221 = vld [vmem:[%s1 + $0x640] sm:$0xff]
  %v222 = vld [vmem:[%s1 + $0x648] sm:$0xff]
  %v223 = vld [vmem:[%s1 + $0x650] sm:$0xff]
  %v224 = vld [vmem:[%s1 + $0x658] sm:$0xff]
  %v225 = vld [vmem:[%s1 + $0x660] sm:$0xff]
  %v226 = vld [vmem:[%s1 + $0x668] sm:$0xff]
  %v227 = vld [vmem:[%s1 + $0x670] sm:$0xff]
  %v228 = vld [vmem:[%s1 + $0x678] sm:$0xff]
  %v229 = vld [vmem:[%s1 + $0x680] sm:$0xff]
  %v230 = vld [vmem:[%s1 + $0x688] sm:$0xff]
  %v231 = vld [vmem:[%s1 + $0x690] sm:$0xff]
  %v232 = vld [vmem:[%s1 + $0x698] sm:$0xff]
  %v233 = vld [vmem:[%s1 + $0x6a0] sm:$0xff]
  %v234 = vld [vmem:[%s1 + $0x6a8] sm:$0xff]
  %v235 = vld [vmem:[%s1 + $0x6b0] sm:$0xff]
  %v236 = vld [vmem:[%s1 + $0x6b8] sm:$0xff]
  %v237 = vld [vmem:[%s1 + $0x6c0] sm:$0xff]
  %v238 = vld [vmem:[%s1 + $0x6c8] sm:$0xff]
  %v239 = vld [vmem:[%s1 + $0x6d0] sm:$0xff]
  %v240 = vld [vmem:[%s1 + $0x6d8] sm:$0xff]
  %v241 = vld [vmem:[%s1 + $0x6e0] sm:$0xff]
  %v242 = vld [vmem:[%s1 + $0x6e8] sm:$0xff]
  %v243 = vld [vmem:[%s1 + $0x6f0] sm:$0xff]
  %v244 = vld [vmem:[%s1 + $0x6f8] sm:$0xff]
  %v245 = vld [vmem:[%s1 + $0x700] sm:$0xff]
  %v246 = vld [vmem:[%s1 + $0x708] sm:$0xff]
  %v247 = vld [vmem:[%s1 + $0x710] sm:$0xff]
  %v248 = vld [vmem:[%s1 + $0x718] sm:$0xff]
  %v249 = vld [vmem:[%s1 + $0x720] sm:$0xff]
  %v250 = vld [vmem:[%s1 + $0x728] sm:$0xff]
  %v251 = vld [vmem:[%s1 + $0x730] sm:$0xff]
  %v252 = vld [vmem:[%s1 + $0x738] sm:$0xff]
  %v253 = vld [vmem:[%s1 + $0x740] sm:$0xff]
  %v254 = vld [vmem:[%s1 + $0x748] sm:$0xff]
  %v255 = vld [vmem:[%s1 + $0x750] sm:$0xff]
  %v256 = vld [vmem:[%s1 + $0x758] sm:$0xff]
  %v257 = vld [vmem:[%s1 + $0x760] sm:$0xff]
  %v258 = vld [vmem:[%s1 + $0x768] sm:$0xff]
  %v259 = vld [vmem:[%s1 + $0x770] sm:$0xff]
  %v260 = vld [vmem:[%s1 + $0x778] sm:$0xff]
  %v261 = vld [vmem:[%s1 + $0x780] sm:$0xff]
  %v262 = vld [vmem:[%s1 + $0x788] sm:$0xff]
  %v263 = vld [vmem:[%s1 + $0x790] sm:$0xff]
  %v264 = vld [vmem:[%s1 + $0x798] sm:$0xff]
  %v265 = vld [vmem:[%s1 + $0x7a0] sm:$0xff]
  %v266 = vld [vmem:[%s1 + $0x7a8] sm:$0xff]
  %v267 = vld [vmem:[%s1 + $0x7b0] sm:$0xff]
  %v268 = vld [vmem:[%s1 + $0x7b8] sm:$0xff]
  %v269 = vld [vmem:[%s1 + $0x7c0] sm:$0xff]
  %v270 = vld [vmem:[%s1 + $0x7c8] sm:$0xff]
  %v271 = vld [vmem:[%s1 + $0x7d0] sm:$0xff]
  %v272 = vld [vmem:[%s1 + $0x7d8] sm:$0xff]
  %v273 = vld [vmem:[%s1 + $0x7e0] sm:$0xff]
  %v274 = vld [vmem:[%s1 + $0x7e8] sm:$0xff]
  %v275 = vld [vmem:[%s1 + $0x7f0] sm:$0xff]
  %v276 = vld [vmem:[%s1 + $0x7f8] sm:$0xff]
  %vm277 = vcmask 64512
  %v278 = vsel %vm277, %v21, 0.0
  %v279 = vsel %vm277, %v22, 0.0
  %v280 = vadd.f32 %v278, %v279
  %v281 = vsel %vm277, %v23, 0.0
  %v282 = vadd.f32 %v280, %v281
  %v283 = vsel %vm277, %v24, 0.0
  %v284 = vadd.f32 %v282, %v283
  %v285 = vsel %vm277, %v25, 0.0
  %v286 = vadd.f32 %v284, %v285
  %v287 = vsel %vm277, %v26, 0.0
  %v288 = vadd.f32 %v286, %v287
  %v289 = vsel %vm277, %v27, 0.0
  %v290 = vadd.f32 %v288, %v289
  %v291 = vsel %vm277, %v28, 0.0
  %v292 = vadd.f32 %v290, %v291
  %v293 = vsel %vm277, %v29, 0.0
  %v294 = vadd.f32 %v292, %v293
  %v295 = vsel %vm277, %v30, 0.0
  %v296 = vadd.f32 %v294, %v295
  %v297 = vsel %vm277, %v31, 0.0
  %v298 = vadd.f32 %v296, %v297
  %v299 = vsel %vm277, %v32, 0.0
  %v300 = vadd.f32 %v298, %v299
  %v301 = vsel %vm277, %v33, 0.0
  %v302 = vadd.f32 %v300, %v301
  %v303 = vsel %vm277, %v34, 0.0
  %v304 = vadd.f32 %v302, %v303
  %v305 = vsel %vm277, %v35, 0.0
  %v306 = vadd.f32 %v304, %v305
  %v307 = vsel %vm277, %v36, 0.0
  %v308 = vadd.f32 %v306, %v307
  %v309 = vsel %vm277, %v37, 0.0
  %v310 = vadd.f32 %v308, %v309
  %v311 = vsel %vm277, %v38, 0.0
  %v312 = vadd.f32 %v310, %v311
  %v313 = vsel %vm277, %v39, 0.0
  %v314 = vadd.f32 %v312, %v313
  %v315 = vsel %vm277, %v40, 0.0
  %v316 = vadd.f32 %v314, %v315
  %v317 = vsel %vm277, %v41, 0.0
  %v318 = vadd.f32 %v316, %v317
  %v319 = vsel %vm277, %v42, 0.0
  %v320 = vadd.f32 %v318, %v319
  %v321 = vsel %vm277, %v43, 0.0
  %v322 = vadd.f32 %v320, %v321
  %v323 = vsel %vm277, %v44, 0.0
  %v324 = vadd.f32 %v322, %v323
  %v325 = vsel %vm277, %v45, 0.0
  %v326 = vadd.f32 %v324, %v325
  %v327 = vsel %vm277, %v46, 0.0
  %v328 = vadd.f32 %v326, %v327
  %v329 = vsel %vm277, %v47, 0.0
  %v330 = vadd.f32 %v328, %v329
  %v331 = vsel %vm277, %v48, 0.0
  %v332 = vadd.f32 %v330, %v331
  %v333 = vsel %vm277, %v49, 0.0
  %v334 = vadd.f32 %v332, %v333
  %v335 = vsel %vm277, %v50, 0.0
  %v336 = vadd.f32 %v334, %v335
  %v337 = vsel %vm277, %v51, 0.0
  %v338 = vadd.f32 %v336, %v337
  %v339 = vsel %vm277, %v52, 0.0
  %v340 = vadd.f32 %v338, %v339
  %v341 = vrot.slane %v340, 4
  %v342 = vadd.f32 %v340, %v341
  %v343 = vrot.slane %v342, 2
  %v344 = vadd.f32 %v342, %v343
  %v345 = vrot.slane %v344, 1
  %v346 = vadd.f32 %v344, %v345
  %v347 = vsel %vm277, %v53, 0.0
  %v348 = vsel %vm277, %v54, 0.0
  %v349 = vadd.f32 %v347, %v348
  %v350 = vsel %vm277, %v55, 0.0
  %v351 = vadd.f32 %v349, %v350
  %v352 = vsel %vm277, %v56, 0.0
  %v353 = vadd.f32 %v351, %v352
  %v354 = vsel %vm277, %v57, 0.0
  %v355 = vadd.f32 %v353, %v354
  %v356 = vsel %vm277, %v58, 0.0
  %v357 = vadd.f32 %v355, %v356
  %v358 = vsel %vm277, %v59, 0.0
  %v359 = vadd.f32 %v357, %v358
  %v360 = vsel %vm277, %v60, 0.0
  %v361 = vadd.f32 %v359, %v360
  %v362 = vsel %vm277, %v61, 0.0
  %v363 = vadd.f32 %v361, %v362
  %v364 = vsel %vm277, %v62, 0.0
  %v365 = vadd.f32 %v363, %v364
  %v366 = vsel %vm277, %v63, 0.0
  %v367 = vadd.f32 %v365, %v366
  %v368 = vsel %vm277, %v64, 0.0
  %v369 = vadd.f32 %v367, %v368
  %v370 = vsel %vm277, %v65, 0.0
  %v371 = vadd.f32 %v369, %v370
  %v372 = vsel %vm277, %v66, 0.0
  %v373 = vadd.f32 %v371, %v372
  %v374 = vsel %vm277, %v67, 0.0
  %v375 = vadd.f32 %v373, %v374
  %v376 = vsel %vm277, %v68, 0.0
  %v377 = vadd.f32 %v375, %v376
  %v378 = vsel %vm277, %v69, 0.0
  %v379 = vadd.f32 %v377, %v378
  %v380 = vsel %vm277, %v70, 0.0
  %v381 = vadd.f32 %v379, %v380
  %v382 = vsel %vm277, %v71, 0.0
  %v383 = vadd.f32 %v381, %v382
  %v384 = vsel %vm277, %v72, 0.0
  %v385 = vadd.f32 %v383, %v384
  %v386 = vsel %vm277, %v73, 0.0
  %v387 = vadd.f32 %v385, %v386
  %v388 = vsel %vm277, %v74, 0.0
  %v389 = vadd.f32 %v387, %v388
  %v390 = vsel %vm277, %v75, 0.0
  %v391 = vadd.f32 %v389, %v390
  %v392 = vsel %vm277, %v76, 0.0
  %v393 = vadd.f32 %v391, %v392
  %v394 = vsel %vm277, %v77, 0.0
  %v395 = vadd.f32 %v393, %v394
  %v396 = vsel %vm277, %v78, 0.0
  %v397 = vadd.f32 %v395, %v396
  %v398 = vsel %vm277, %v79, 0.0
  %v399 = vadd.f32 %v397, %v398
  %v400 = vsel %vm277, %v80, 0.0
  %v401 = vadd.f32 %v399, %v400
  %v402 = vsel %vm277, %v81, 0.0
  %v403 = vadd.f32 %v401, %v402
  %v404 = vsel %vm277, %v82, 0.0
  %v405 = vadd.f32 %v403, %v404
  %v406 = vsel %vm277, %v83, 0.0
  %v407 = vadd.f32 %v405, %v406
  %v408 = vsel %vm277, %v84, 0.0
  %v409 = vadd.f32 %v407, %v408
  %v410 = vrot.slane %v409, 4
  %v411 = vadd.f32 %v409, %v410
  %v412 = vrot.slane %v411, 2
  %v413 = vadd.f32 %v411, %v412
  %v414 = vrot.slane %v413, 1
  %v415 = vadd.f32 %v413, %v414
  %v416 = vsel %vm277, %v85, 0.0
  %v417 = vsel %vm277, %v86, 0.0
  %v418 = vadd.f32 %v416, %v417
  %v419 = vsel %vm277, %v87, 0.0
  %v420 = vadd.f32 %v418, %v419
  %v421 = vsel %vm277, %v88, 0.0
  %v422 = vadd.f32 %v420, %v421
  %v423 = vsel %vm277, %v89, 0.0
  %v424 = vadd.f32 %v422, %v423
  %v425 = vsel %vm277, %v90, 0.0
  %v426 = vadd.f32 %v424, %v425
  %v427 = vsel %vm277, %v91, 0.0
  %v428 = vadd.f32 %v426, %v427
  %v429 = vsel %vm277, %v92, 0.0
  %v430 = vadd.f32 %v428, %v429
  %v431 = vsel %vm277, %v93, 0.0
  %v432 = vadd.f32 %v430, %v431
  %v433 = vsel %vm277, %v94, 0.0
  %v434 = vadd.f32 %v432, %v433
  %v435 = vsel %vm277, %v95, 0.0
  %v436 = vadd.f32 %v434, %v435
  %v437 = vsel %vm277, %v96, 0.0
  %v438 = vadd.f32 %v436, %v437
  %v439 = vsel %vm277, %v97, 0.0
  %v440 = vadd.f32 %v438, %v439
  %v441 = vsel %vm277, %v98, 0.0
  %v442 = vadd.f32 %v440, %v441
  %v443 = vsel %vm277, %v99, 0.0
  %v444 = vadd.f32 %v442, %v443
  %v445 = vsel %vm277, %v100, 0.0
  %v446 = vadd.f32 %v444, %v445
  %v447 = vsel %vm277, %v101, 0.0
  %v448 = vadd.f32 %v446, %v447
  %v449 = vsel %vm277, %v102, 0.0
  %v450 = vadd.f32 %v448, %v449
  %v451 = vsel %vm277, %v103, 0.0
  %v452 = vadd.f32 %v450, %v451
  %v453 = vsel %vm277, %v104, 0.0
  %v454 = vadd.f32 %v452, %v453
  %v455 = vsel %vm277, %v105, 0.0
  %v456 = vadd.f32 %v454, %v455
  %v457 = vsel %vm277, %v106, 0.0
  %v458 = vadd.f32 %v456, %v457
  %v459 = vsel %vm277, %v107, 0.0
  %v460 = vadd.f32 %v458, %v459
  %v461 = vsel %vm277, %v108, 0.0
  %v462 = vadd.f32 %v460, %v461
  %v463 = vsel %vm277, %v109, 0.0
  %v464 = vadd.f32 %v462, %v463
  %v465 = vsel %vm277, %v110, 0.0
  %v466 = vadd.f32 %v464, %v465
  %v467 = vsel %vm277, %v111, 0.0
  %v468 = vadd.f32 %v466, %v467
  %v469 = vsel %vm277, %v112, 0.0
  %v470 = vadd.f32 %v468, %v469
  %v471 = vsel %vm277, %v113, 0.0
  %v472 = vadd.f32 %v470, %v471
  %v473 = vsel %vm277, %v114, 0.0
  %v474 = vadd.f32 %v472, %v473
  %v475 = vsel %vm277, %v115, 0.0
  %v476 = vadd.f32 %v474, %v475
  %v477 = vsel %vm277, %v116, 0.0
  %v478 = vadd.f32 %v476, %v477
  %v479 = vrot.slane %v478, 4
  %v480 = vadd.f32 %v478, %v479
  %v481 = vrot.slane %v480, 2
  %v482 = vadd.f32 %v480, %v481
  %v483 = vrot.slane %v482, 1
  %v484 = vadd.f32 %v482, %v483
  %v485 = vsel %vm277, %v117, 0.0
  %v486 = vsel %vm277, %v118, 0.0
  %v487 = vadd.f32 %v485, %v486
  %v488 = vsel %vm277, %v119, 0.0
  %v489 = vadd.f32 %v487, %v488
  %v490 = vsel %vm277, %v120, 0.0
  %v491 = vadd.f32 %v489, %v490
  %v492 = vsel %vm277, %v121, 0.0
  %v493 = vadd.f32 %v491, %v492
  %v494 = vsel %vm277, %v122, 0.0
  %v495 = vadd.f32 %v493, %v494
  %v496 = vsel %vm277, %v123, 0.0
  %v497 = vadd.f32 %v495, %v496
  %v498 = vsel %vm277, %v124, 0.0
  %v499 = vadd.f32 %v497, %v498
  %v500 = vsel %vm277, %v125, 0.0
  %v501 = vadd.f32 %v499, %v500
  %v502 = vsel %vm277, %v126, 0.0
  %v503 = vadd.f32 %v501, %v502
  %v504 = vsel %vm277, %v127, 0.0
  %v505 = vadd.f32 %v503, %v504
  %v506 = vsel %vm277, %v128, 0.0
  %v507 = vadd.f32 %v505, %v506
  %v508 = vsel %vm277, %v129, 0.0
  %v509 = vadd.f32 %v507, %v508
  %v510 = vsel %vm277, %v130, 0.0
  %v511 = vadd.f32 %v509, %v510
  %v512 = vsel %vm277, %v131, 0.0
  %v513 = vadd.f32 %v511, %v512
  %v514 = vsel %vm277, %v132, 0.0
  %v515 = vadd.f32 %v513, %v514
  %v516 = vsel %vm277, %v133, 0.0
  %v517 = vadd.f32 %v515, %v516
  %v518 = vsel %vm277, %v134, 0.0
  %v519 = vadd.f32 %v517, %v518
  %v520 = vsel %vm277, %v135, 0.0
  %v521 = vadd.f32 %v519, %v520
  %v522 = vsel %vm277, %v136, 0.0
  %v523 = vadd.f32 %v521, %v522
  %v524 = vsel %vm277, %v137, 0.0
  %v525 = vadd.f32 %v523, %v524
  %v526 = vsel %vm277, %v138, 0.0
  %v527 = vadd.f32 %v525, %v526
  %v528 = vsel %vm277, %v139, 0.0
  %v529 = vadd.f32 %v527, %v528
  %v530 = vsel %vm277, %v140, 0.0
  %v531 = vadd.f32 %v529, %v530
  %v532 = vsel %vm277, %v141, 0.0
  %v533 = vadd.f32 %v531, %v532
  %v534 = vsel %vm277, %v142, 0.0
  %v535 = vadd.f32 %v533, %v534
  %v536 = vsel %vm277, %v143, 0.0
  %v537 = vadd.f32 %v535, %v536
  %v538 = vsel %vm277, %v144, 0.0
  %v539 = vadd.f32 %v537, %v538
  %v540 = vsel %vm277, %v145, 0.0
  %v541 = vadd.f32 %v539, %v540
  %v542 = vsel %vm277, %v146, 0.0
  %v543 = vadd.f32 %v541, %v542
  %v544 = vsel %vm277, %v147, 0.0
  %v545 = vadd.f32 %v543, %v544
  %v546 = vsel %vm277, %v148, 0.0
  %v547 = vadd.f32 %v545, %v546
  %v548 = vrot.slane %v547, 4
  %v549 = vadd.f32 %v547, %v548
  %v550 = vrot.slane %v549, 2
  %v551 = vadd.f32 %v549, %v550
  %v552 = vrot.slane %v551, 1
  %v553 = vadd.f32 %v551, %v552
  %v554 = vsel %vm277, %v149, 0.0
  %v555 = vsel %vm277, %v150, 0.0
  %v556 = vadd.f32 %v554, %v555
  %v557 = vsel %vm277, %v151, 0.0
  %v558 = vadd.f32 %v556, %v557
  %v559 = vsel %vm277, %v152, 0.0
  %v560 = vadd.f32 %v558, %v559
  %v561 = vsel %vm277, %v153, 0.0
  %v562 = vadd.f32 %v560, %v561
  %v563 = vsel %vm277, %v154, 0.0
  %v564 = vadd.f32 %v562, %v563
  %v565 = vsel %vm277, %v155, 0.0
  %v566 = vadd.f32 %v564, %v565
  %v567 = vsel %vm277, %v156, 0.0
  %v568 = vadd.f32 %v566, %v567
  %v569 = vsel %vm277, %v157, 0.0
  %v570 = vadd.f32 %v568, %v569
  %v571 = vsel %vm277, %v158, 0.0
  %v572 = vadd.f32 %v570, %v571
  %v573 = vsel %vm277, %v159, 0.0
  %v574 = vadd.f32 %v572, %v573
  %v575 = vsel %vm277, %v160, 0.0
  %v576 = vadd.f32 %v574, %v575
  %v577 = vsel %vm277, %v161, 0.0
  %v578 = vadd.f32 %v576, %v577
  %v579 = vsel %vm277, %v162, 0.0
  %v580 = vadd.f32 %v578, %v579
  %v581 = vsel %vm277, %v163, 0.0
  %v582 = vadd.f32 %v580, %v581
  %v583 = vsel %vm277, %v164, 0.0
  %v584 = vadd.f32 %v582, %v583
  %v585 = vsel %vm277, %v165, 0.0
  %v586 = vadd.f32 %v584, %v585
  %v587 = vsel %vm277, %v166, 0.0
  %v588 = vadd.f32 %v586, %v587
  %v589 = vsel %vm277, %v167, 0.0
  %v590 = vadd.f32 %v588, %v589
  %v591 = vsel %vm277, %v168, 0.0
  %v592 = vadd.f32 %v590, %v591
  %v593 = vsel %vm277, %v169, 0.0
  %v594 = vadd.f32 %v592, %v593
  %v595 = vsel %vm277, %v170, 0.0
  %v596 = vadd.f32 %v594, %v595
  %v597 = vsel %vm277, %v171, 0.0
  %v598 = vadd.f32 %v596, %v597
  %v599 = vsel %vm277, %v172, 0.0
  %v600 = vadd.f32 %v598, %v599
  %v601 = vsel %vm277, %v173, 0.0
  %v602 = vadd.f32 %v600, %v601
  %v603 = vsel %vm277, %v174, 0.0
  %v604 = vadd.f32 %v602, %v603
  %v605 = vsel %vm277, %v175, 0.0
  %v606 = vadd.f32 %v604, %v605
  %v607 = vsel %vm277, %v176, 0.0
  %v608 = vadd.f32 %v606, %v607
  %v609 = vsel %vm277, %v177, 0.0
  %v610 = vadd.f32 %v608, %v609
  %v611 = vsel %vm277, %v178, 0.0
  %v612 = vadd.f32 %v610, %v611
  %v613 = vsel %vm277, %v179, 0.0
  %v614 = vadd.f32 %v612, %v613
  %v615 = vsel %vm277, %v180, 0.0
  %v616 = vadd.f32 %v614, %v615
  %v617 = vrot.slane %v616, 4
  %v618 = vadd.f32 %v616, %v617
  %v619 = vrot.slane %v618, 2
  %v620 = vadd.f32 %v618, %v619
  %v621 = vrot.slane %v620, 1
  %v622 = vadd.f32 %v620, %v621
  %v623 = vsel %vm277, %v181, 0.0
  %v624 = vsel %vm277, %v182, 0.0
  %v625 = vadd.f32 %v623, %v624
  %v626 = vsel %vm277, %v183, 0.0
  %v627 = vadd.f32 %v625, %v626
  %v628 = vsel %vm277, %v184, 0.0
  %v629 = vadd.f32 %v627, %v628
  %v630 = vsel %vm277, %v185, 0.0
  %v631 = vadd.f32 %v629, %v630
  %v632 = vsel %vm277, %v186, 0.0
  %v633 = vadd.f32 %v631, %v632
  %v634 = vsel %vm277, %v187, 0.0
  %v635 = vadd.f32 %v633, %v634
  %v636 = vsel %vm277, %v188, 0.0
  %v637 = vadd.f32 %v635, %v636
  %v638 = vsel %vm277, %v189, 0.0
  %v639 = vadd.f32 %v637, %v638
  %v640 = vsel %vm277, %v190, 0.0
  %v641 = vadd.f32 %v639, %v640
  %v642 = vsel %vm277, %v191, 0.0
  %v643 = vadd.f32 %v641, %v642
  %v644 = vsel %vm277, %v192, 0.0
  %v645 = vadd.f32 %v643, %v644
  %v646 = vsel %vm277, %v193, 0.0
  %v647 = vadd.f32 %v645, %v646
  %v648 = vsel %vm277, %v194, 0.0
  %v649 = vadd.f32 %v647, %v648
  %v650 = vsel %vm277, %v195, 0.0
  %v651 = vadd.f32 %v649, %v650
  %v652 = vsel %vm277, %v196, 0.0
  %v653 = vadd.f32 %v651, %v652
  %v654 = vsel %vm277, %v197, 0.0
  %v655 = vadd.f32 %v653, %v654
  %v656 = vsel %vm277, %v198, 0.0
  %v657 = vadd.f32 %v655, %v656
  %v658 = vsel %vm277, %v199, 0.0
  %v659 = vadd.f32 %v657, %v658
  %v660 = vsel %vm277, %v200, 0.0
  %v661 = vadd.f32 %v659, %v660
  %v662 = vsel %vm277, %v201, 0.0
  %v663 = vadd.f32 %v661, %v662
  %v664 = vsel %vm277, %v202, 0.0
  %v665 = vadd.f32 %v663, %v664
  %v666 = vsel %vm277, %v203, 0.0
  %v667 = vadd.f32 %v665, %v666
  %v668 = vsel %vm277, %v204, 0.0
  %v669 = vadd.f32 %v667, %v668
  %v670 = vsel %vm277, %v205, 0.0
  %v671 = vadd.f32 %v669, %v670
  %v672 = vsel %vm277, %v206, 0.0
  %v673 = vadd.f32 %v671, %v672
  %v674 = vsel %vm277, %v207, 0.0
  %v675 = vadd.f32 %v673, %v674
  %v676 = vsel %vm277, %v208, 0.0
  %v677 = vadd.f32 %v675, %v676
  %v678 = vsel %vm277, %v209, 0.0
  %v679 = vadd.f32 %v677, %v678
  %v680 = vsel %vm277, %v210, 0.0
  %v681 = vadd.f32 %v679, %v680
  %v682 = vsel %vm277, %v211, 0.0
  %v683 = vadd.f32 %v681, %v682
  %v684 = vsel %vm277, %v212, 0.0
  %v685 = vadd.f32 %v683, %v684
  %v686 = vrot.slane %v685, 4
  %v687 = vadd.f32 %v685, %v686
  %v688 = vrot.slane %v687, 2
  %v689 = vadd.f32 %v687, %v688
  %v690 = vrot.slane %v689, 1
  %v691 = vadd.f32 %v689, %v690
  %v692 = vsel %vm277, %v213, 0.0
  %v693 = vsel %vm277, %v214, 0.0
  %v694 = vadd.f32 %v692, %v693
  %v695 = vsel %vm277, %v215, 0.0
  %v696 = vadd.f32 %v694, %v695
  %v697 = vsel %vm277, %v216, 0.0
  %v698 = vadd.f32 %v696, %v697
  %v699 = vsel %vm277, %v217, 0.0
  %v700 = vadd.f32 %v698, %v699
  %v701 = vsel %vm277, %v218, 0.0
  %v702 = vadd.f32 %v700, %v701
  %v703 = vsel %vm277, %v219, 0.0
  %v704 = vadd.f32 %v702, %v703
  %v705 = vsel %vm277, %v220, 0.0
  %v706 = vadd.f32 %v704, %v705
  %v707 = vsel %vm277, %v221, 0.0
  %v708 = vadd.f32 %v706, %v707
  %v709 = vsel %vm277, %v222, 0.0
  %v710 = vadd.f32 %v708, %v709
  %v711 = vsel %vm277, %v223, 0.0
  %v712 = vadd.f32 %v710, %v711
  %v713 = vsel %vm277, %v224, 0.0
  %v714 = vadd.f32 %v712, %v713
  %v715 = vsel %vm277, %v225, 0.0
  %v716 = vadd.f32 %v714, %v715
  %v717 = vsel %vm277, %v226, 0.0
  %v718 = vadd.f32 %v716, %v717
  %v719 = vsel %vm277, %v227, 0.0
  %v720 = vadd.f32 %v718, %v719
  %v721 = vsel %vm277, %v228, 0.0
  %v722 = vadd.f32 %v720, %v721
  %v723 = vsel %vm277, %v229, 0.0
  %v724 = vadd.f32 %v722, %v723
  %v725 = vsel %vm277, %v230, 0.0
  %v726 = vadd.f32 %v724, %v725
  %v727 = vsel %vm277, %v231, 0.0
  %v728 = vadd.f32 %v726, %v727
  %v729 = vsel %vm277, %v232, 0.0
  %v730 = vadd.f32 %v728, %v729
  %v731 = vsel %vm277, %v233, 0.0
  %v732 = vadd.f32 %v730, %v731
  %v733 = vsel %vm277, %v234, 0.0
  %v734 = vadd.f32 %v732, %v733
  %v735 = vsel %vm277, %v235, 0.0
  %v736 = vadd.f32 %v734, %v735
  %v737 = vsel %vm277, %v236, 0.0
  %v738 = vadd.f32 %v736, %v737
  %v739 = vsel %vm277, %v237, 0.0
  %v740 = vadd.f32 %v738, %v739
  %v741 = vsel %vm277, %v238, 0.0
  %v742 = vadd.f32 %v740, %v741
  %v743 = vsel %vm277, %v239, 0.0
  %v744 = vadd.f32 %v742, %v743
  %v745 = vsel %vm277, %v240, 0.0
  %v746 = vadd.f32 %v744, %v745
  %v747 = vsel %vm277, %v241, 0.0
  %v748 = vadd.f32 %v746, %v747
  %v749 = vsel %vm277, %v242, 0.0
  %v750 = vadd.f32 %v748, %v749
  %v751 = vsel %vm277, %v243, 0.0
  %v752 = vadd.f32 %v750, %v751
  %v753 = vsel %vm277, %v244, 0.0
  %v754 = vadd.f32 %v752, %v753
  %v755 = vrot.slane %v754, 4
  %v756 = vadd.f32 %v754, %v755
  %v757 = vrot.slane %v756, 2
  %v758 = vadd.f32 %v756, %v757
  %v759 = vrot.slane %v758, 1
  %v760 = vadd.f32 %v758, %v759
  %v761 = vsel %vm277, %v245, 0.0
  %v762 = vsel %vm277, %v246, 0.0
  %v763 = vadd.f32 %v761, %v762
  %v764 = vsel %vm277, %v247, 0.0
  %v765 = vadd.f32 %v763, %v764
  %v766 = vsel %vm277, %v248, 0.0
  %v767 = vadd.f32 %v765, %v766
  %v768 = vsel %vm277, %v249, 0.0
  %v769 = vadd.f32 %v767, %v768
  %v770 = vsel %vm277, %v250, 0.0
  %v771 = vadd.f32 %v769, %v770
  %v772 = vsel %vm277, %v251, 0.0
  %v773 = vadd.f32 %v771, %v772
  %v774 = vsel %vm277, %v252, 0.0
  %v775 = vadd.f32 %v773, %v774
  %v776 = vsel %vm277, %v253, 0.0
  %v777 = vadd.f32 %v775, %v776
  %v778 = vsel %vm277, %v254, 0.0
  %v779 = vadd.f32 %v777, %v778
  %v780 = vsel %vm277, %v255, 0.0
  %v781 = vadd.f32 %v779, %v780
  %v782 = vsel %vm277, %v256, 0.0
  %v783 = vadd.f32 %v781, %v782
  %v784 = vsel %vm277, %v257, 0.0
  %v785 = vadd.f32 %v783, %v784
  %v786 = vsel %vm277, %v258, 0.0
  %v787 = vadd.f32 %v785, %v786
  %v788 = vsel %vm277, %v259, 0.0
  %v789 = vadd.f32 %v787, %v788
  %v790 = vsel %vm277, %v260, 0.0
  %v791 = vadd.f32 %v789, %v790
  %v792 = vsel %vm277, %v261, 0.0
  %v793 = vadd.f32 %v791, %v792
  %v794 = vsel %vm277, %v262, 0.0
  %v795 = vadd.f32 %v793, %v794
  %v796 = vsel %vm277, %v263, 0.0
  %v797 = vadd.f32 %v795, %v796
  %v798 = vsel %vm277, %v264, 0.0
  %v799 = vadd.f32 %v797, %v798
  %v800 = vsel %vm277, %v265, 0.0
  %v801 = vadd.f32 %v799, %v800
  %v802 = vsel %vm277, %v266, 0.0
  %v803 = vadd.f32 %v801, %v802
  %v804 = vsel %vm277, %v267, 0.0
  %v805 = vadd.f32 %v803, %v804
  %v806 = vsel %vm277, %v268, 0.0
  %v807 = vadd.f32 %v805, %v806
  %v808 = vsel %vm277, %v269, 0.0
  %v809 = vadd.f32 %v807, %v808
  %v810 = vsel %vm277, %v270, 0.0
  %v811 = vadd.f32 %v809, %v810
  %v812 = vsel %vm277, %v271, 0.0
  %v813 = vadd.f32 %v811, %v812
  %v814 = vsel %vm277, %v272, 0.0
  %v815 = vadd.f32 %v813, %v814
  %v816 = vsel %vm277, %v273, 0.0
  %v817 = vadd.f32 %v815, %v816
  %v818 = vsel %vm277, %v274, 0.0
  %v819 = vadd.f32 %v817, %v818
  %v820 = vsel %vm277, %v275, 0.0
  %v821 = vadd.f32 %v819, %v820
  %v822 = vsel %vm277, %v276, 0.0
  %v823 = vadd.f32 %v821, %v822
  %v824 = vrot.slane %v823, 4
  %v825 = vadd.f32 %v823, %v824
  %v826 = vrot.slane %v825, 2
  %v827 = vadd.f32 %v825, %v826
  %v828 = vrot.slane %v827, 1
  %v829 = vadd.f32 %v827, %v828
  %v830 = vld [vmem:[%s2] sm:$0xff]
  %vm839 = vcmask 1041409
  %v840 = vsel %vm839, %v415, %v346
  %vm841 = vcmask 1042434
  %v842 = vsel %vm841, %v484, %v840
  %vm843 = vcmask 1043459
  %v844 = vsel %vm843, %v553, %v842
  %vm845 = vcmask 1044484
  %v846 = vsel %vm845, %v622, %v844
  %vm847 = vcmask 1045509
  %v848 = vsel %vm847, %v691, %v846
  %vm849 = vcmask 1046534
  %v850 = vsel %vm849, %v760, %v848
  %vm851 = vcmask 1047559
  %v852 = vsel %vm851, %v829, %v850
  %v853 = vsel %vm277, %v852, 0
  %855 = vmatprep.subr.mxu0 0.0
  %856 = vmatpush1.msra.mxu0 %v830
  %857 = vmatprep.subr.mxu0 0.0
  %858 = vmatpush1.msra.mxu0 0.0
  %859 = vmatprep.subr.mxu0 0.0
  %860 = vmatpush1.msra.mxu0 0.0
  %861 = vmatprep.subr.mxu0 0.0
  %862 = vmatpush1.msra.mxu0 0.0
  %863 = vmatprep.subr.mxu0 0.0
  %864 = vmatpush1.msra.mxu0 0.0
  %865 = vmatprep.subr.mxu0 0.0
  %866 = vmatpush1.msra.mxu0 0.0
  %867 = vmatprep.subr.mxu0 0.0
  %868 = vmatpush1.msra.mxu0 0.0
  %869 = vmatprep.subr.mxu0 0.0
  %870 = vmatpush1.msra.mxu0 0.0
  %871 = vmatprep.subr.mxu0 0.0
  %872 = vmatpush1.msra.mxu0 0.0
  %873 = vmatprep.subr.mxu0 0.0
  %874 = vmatpush1.msra.mxu0 0.0
  %875 = vmatprep.subr.mxu0 0.0
  %876 = vmatpush1.msra.mxu0 0.0
  %877 = vmatprep.subr.mxu0 0.0
  %878 = vmatpush1.msra.mxu0 0.0
  %879 = vmatprep.subr.mxu0 0.0
  %880 = vmatpush1.msra.mxu0 0.0
  %881 = vmatprep.subr.mxu0 0.0
  %882 = vmatpush1.msra.mxu0 0.0
  %883 = vmatprep.subr.mxu0 0.0
  %884 = vmatpush1.msra.mxu0 0.0
  %885 = vmatprep.subr.mxu0 0.0
  %886 = vmatpush1.msra.mxu0 0.0
  %887 = vmatprep.subr.mxu0 0.0
  %888 = vmatpush1.msra.mxu0 0.0
  %889 = vmatprep.subr.mxu0 0.0
  %890 = vmatpush1.msra.mxu0 0.0
  %891 = vmatprep.subr.mxu0 0.0
  %892 = vmatpush1.msra.mxu0 0.0
  %893 = vmatprep.subr.mxu0 0.0
  %894 = vmatpush1.msra.mxu0 0.0
  %895 = vmatprep.subr.mxu0 0.0
  %896 = vmatpush1.msra.mxu0 0.0
  %897 = vmatprep.subr.mxu0 0.0
  %898 = vmatpush1.msra.mxu0 0.0
  %899 = vmatprep.subr.mxu0 0.0
  %900 = vmatpush1.msra.mxu0 0.0
  %901 = vmatprep.subr.mxu0 0.0
  %902 = vmatpush1.msra.mxu0 0.0
  %903 = vmatprep.subr.mxu0 0.0
  %904 = vmatpush1.msra.mxu0 0.0
  %905 = vmatprep.subr.mxu0 0.0
  %906 = vmatpush1.msra.mxu0 0.0
  %907 = vmatprep.subr.mxu0 0.0
  %908 = vmatpush1.msra.mxu0 0.0
  %909 = vmatprep.subr.mxu0 0.0
  %910 = vmatpush1.msra.mxu0 0.0
  %911 = vmatprep.subr.mxu0 0.0
  %912 = vmatpush1.msra.mxu0 0.0
  %913 = vmatprep.subr.mxu0 0.0
  %914 = vmatpush1.msra.mxu0 0.0
  %915 = vmatprep.subr.mxu0 0.0
  %916 = vmatpush1.msra.mxu0 0.0
  %917 = vmatprep.subr.mxu0 0.0
  %918 = vmatpush1.msra.mxu0 0.0
  %919 = vmatprep.mubr.f32.mxu0 0.0
  %920 = vmatmul.mubr.f32.gmra.mrb[0].mxu0 %v853
  %v921 = vpop.f32.mrb[0].mxu0
  %v922 = vadd.f32 0.0, %v921
  %v923 = vpop.f32.mrb[0].mxu0
  %924 = vdwg.mxu0
  %v925 = vmul.f32 %v922, %v922
  %926 = vadd.xlane.f32.xlu0 %v925
  %v927 = vpop.xlane.xlu0 %926
  %v928 = vmax.f32 %v927, 1e-24
  %v929 = vrsqrt.pop %v928
  %v930 = vmul.f32 %v922, %v929
  %v931 = vmul.f32 %v929, %v929
  %v932 = vmul.f32 %v927, %v931
  %v933 = vld [vmem:[%s3] sm:$0xff]
  %v934 = vld [vmem:[%s3 + $0x8] sm:$0xff]
  %v935 = vld [vmem:[%s3 + $0x10] sm:$0xff]
  %v936 = vld [vmem:[%s3 + $0x18] sm:$0xff]
  %v937 = vld [vmem:[%s3 + $0x20] sm:$0xff]
  %v938 = vld [vmem:[%s3 + $0x28] sm:$0xff]
  %v939 = vld [vmem:[%s3 + $0x30] sm:$0xff]
  %v940 = vld [vmem:[%s3 + $0x38] sm:$0xff]
  %v941 = vld [vmem:[%s3 + $0x40] sm:$0xff]
  %v942 = vld [vmem:[%s3 + $0x48] sm:$0xff]
  %v943 = vld [vmem:[%s3 + $0x50] sm:$0xff]
  %v944 = vld [vmem:[%s3 + $0x58] sm:$0xff]
  %v945 = vld [vmem:[%s3 + $0x60] sm:$0xff]
  %v946 = vld [vmem:[%s3 + $0x68] sm:$0xff]
  %v947 = vld [vmem:[%s3 + $0x70] sm:$0xff]
  %v948 = vld [vmem:[%s3 + $0x78] sm:$0xff]
  %949 = vmatprep.subr.mxu0 0.0
  %950 = vmatpush1.msra.mxu0 %v933
  %951 = vmatprep.subr.mxu0 0.0
  %952 = vmatpush1.msra.mxu0 %v934
  %953 = vmatprep.subr.mxu0 0.0
  %954 = vmatpush1.msra.mxu0 %v935
  %955 = vmatprep.subr.mxu0 0.0
  %956 = vmatpush1.msra.mxu0 %v936
  %957 = vmatprep.subr.mxu0 0.0
  %958 = vmatpush1.msra.mxu0 %v937
  %959 = vmatprep.subr.mxu0 0.0
  %960 = vmatpush1.msra.mxu0 %v938
  %961 = vmatprep.subr.mxu0 0.0
  %962 = vmatpush1.msra.mxu0 %v939
  %963 = vmatprep.subr.mxu0 0.0
  %964 = vmatpush1.msra.mxu0 %v940
  %965 = vmatprep.subr.mxu0 0.0
  %966 = vmatpush1.msra.mxu0 %v941
  %967 = vmatprep.subr.mxu0 0.0
  %968 = vmatpush1.msra.mxu0 %v942
  %969 = vmatprep.subr.mxu0 0.0
  %970 = vmatpush1.msra.mxu0 %v943
  %971 = vmatprep.subr.mxu0 0.0
  %972 = vmatpush1.msra.mxu0 %v944
  %973 = vmatprep.subr.mxu0 0.0
  %974 = vmatpush1.msra.mxu0 %v945
  %975 = vmatprep.subr.mxu0 0.0
  %976 = vmatpush1.msra.mxu0 %v946
  %977 = vmatprep.subr.mxu0 0.0
  %978 = vmatpush1.msra.mxu0 %v947
  %979 = vmatprep.subr.mxu0 0.0
  %980 = vmatpush1.msra.mxu0 %v948
  %981 = vmatprep.subr.mxu0 0.0
  %982 = vmatpush1.msra.mxu0 0.0
  %983 = vmatprep.subr.mxu0 0.0
  %984 = vmatpush1.msra.mxu0 0.0
  %985 = vmatprep.subr.mxu0 0.0
  %986 = vmatpush1.msra.mxu0 0.0
  %987 = vmatprep.subr.mxu0 0.0
  %988 = vmatpush1.msra.mxu0 0.0
  %989 = vmatprep.subr.mxu0 0.0
  %990 = vmatpush1.msra.mxu0 0.0
  %991 = vmatprep.subr.mxu0 0.0
  %992 = vmatpush1.msra.mxu0 0.0
  %993 = vmatprep.subr.mxu0 0.0
  %994 = vmatpush1.msra.mxu0 0.0
  %995 = vmatprep.subr.mxu0 0.0
  %996 = vmatpush1.msra.mxu0 0.0
  %997 = vmatprep.subr.mxu0 0.0
  %998 = vmatpush1.msra.mxu0 0.0
  %999 = vmatprep.subr.mxu0 0.0
  %1000 = vmatpush1.msra.mxu0 0.0
  %1001 = vmatprep.subr.mxu0 0.0
  %1002 = vmatpush1.msra.mxu0 0.0
  %1003 = vmatprep.subr.mxu0 0.0
  %1004 = vmatpush1.msra.mxu0 0.0
  %1005 = vmatprep.subr.mxu0 0.0
  %1006 = vmatpush1.msra.mxu0 0.0
  %1007 = vmatprep.subr.mxu0 0.0
  %1008 = vmatpush1.msra.mxu0 0.0
  %1009 = vmatprep.subr.mxu0 0.0
  %1010 = vmatpush1.msra.mxu0 0.0
  %1011 = vmatprep.subr.mxu0 0.0
  %1012 = vmatpush1.msra.mxu0 0.0
  %1013 = vmatprep.mubr.f32.mxu0 0.0
  %1014 = vmatmul.mubr.f32.gmra.mrb[0].mxu0 %v930
  %v1015 = vpop.f32.mrb[0].mxu0
  %v1016 = vadd.f32 0.0, %v1015
  %v1017 = vpop.f32.mrb[0].mxu0
  %1018 = vdwg.mxu0
  %v1019 = vld [vmem:[%s4] sm:$0x1]
  %v1021 = vlaneseq
  %v1022 = vshrl.u32 %v1021, 7
  %v1023 = vsub.s32 0, %v1022
  %v1024 = vrot.slane %v1019, %v1023
  %v1026 = vadd.f32 %v932, %v1024
  %v1027 = vmul.f32 %v1016, 2.0
  %v1028 = vsub.f32 %v1026, %v1027
  %v1029 = vmax.f32 %v1028, 0.0
  %v1030 = vrsqrt.pop %v1029
  %v1031 = vmul.f32 %v1029, %v1030
  %vm1032 = vcmp.eq.f32.partialorder %v1029, inf
  %v1033 = vsel %vm1032, %v1029, %v1031
  %vm1034 = vcmp.eq.f32.partialorder %v1029, 0.0
  %v1035 = vand.u32 %v1029, 2147483648
  %v1036 = vsel %vm1034, %v1035, %v1033
  %s1037 = sld [smem:[#allocation2]]
  %s1038 = sand.u32 2147483647, %s1037
  %s1039 = ssub.f32 0.0, %s1038
  %v1040 = vstv %s1039
  %v1041 = vmul.f32 %v1036, %v1040
  %1042 = vst [vmem:[%s5] sm:$0xff] %v1041
  // Predicated region
  $region22: #{disc_forward.1} parent=0 // pred_check
    _
  $region23: #{disc_forward.1} parent=0 // pred_check_branch
    %1044 = sbr.rel (0) target = $region25
  $region24: #{disc_forward.1} parent=0 // pred_region
    _
  $region25: #{disc_forward.1} parent=0 // pred_fallthru
    _
  // Predicated region
  $region26: #{disc_forward.1} parent=0 // pred_check
    _
  $region27: #{disc_forward.1} parent=0 // pred_check_branch
    %1046 = sbr.rel (0) target = $region29
  $region28: #{disc_forward.1} parent=0 // pred_region
    _
  $region29: #{disc_forward.1} parent=0 // pred_fallthru
    _

</llo_original>
